<compile_context>
chip_gen: v6e
topology: v6e:2x2x1
jax: 0.10.0
libtpu: 0.0.40
codegen_flags: <defaults>
</compile_context>

<pallas_src>
import functools
import inspect

import jax
import jax.numpy as jnp
from jax import lax
from jax.experimental import pallas as pl
from jax.experimental.pallas import tpu as pltpu


def semantic_kernel(img_ref, word_ref, w1_ref, w2_ref, v_ref, out_ref,
                    fwh_ref, fwd_ref, *, i_chunk):
    """One (batch-tile, class-tile) grid step.

    img_ref : (Bt, P, Dp)  mm_dtype  image spatial features (lane-dense D)
    word_ref: (Cc, Dw)     f32       this class tile's word features
    w1_ref  : (Dp, Ip)     mm_dtype  fc_1 weight
    w2_ref  : (Dw, Ip)     mm_dtype  fc_2 weight
    v_ref   : (1, Ip)      f32       folded fc_3/fc_a vector  W3 @ wa^T
    out_ref : (Bt, Cc, Dp) f32
    fwh_ref : (Bt, P, Ip)  mm_dtype  fc_1 cache (scratch, persists across ci)
    fwd_ref : (Cc, Ip)     mm_dtype  fc_2 result for this class tile (scratch)
    """
    bt, p, _ = img_ref.shape
    cc = word_ref.shape[0]
    ip = fwh_ref.shape[2]
    n_chunks = ip // i_chunk
    mm_dtype = w1_ref.dtype

    # ---- fc_1: computed once per batch tile, cached in VMEM scratch --------
    # Valid because the class axis is innermost and marked "arbitrary" (never
    # megacore-split), so ci==0 always runs first for each batch tile.
    @pl.when(pl.program_id(1) == 0)
    def _():
        def fc1_body(b, carry):
            # f32 MXU accumulation; cast to mm_dtype immediately so the f32
            # copy never outlives one loop iteration.
            fwh_ref[b] = jnp.dot(
                img_ref[b], w1_ref[...],
                preferred_element_type=jnp.float32).astype(mm_dtype)
            return carry
        lax.fori_loop(0, bt, fc1_body, 0)

    # ---- fc_2 for this class tile (tiny matmul, once per grid step) --------
    fwd_ref[...] = jnp.dot(
        word_ref[...].astype(mm_dtype), w2_ref[...],
        preferred_element_type=jnp.float32).astype(mm_dtype)

    # ---- per image: chunked tanh reduction -> softmax -> pooling -----------
    def per_image(b, carry):
        fwh_b = fwh_ref.at[b]        # (P, Ip) ref view (no load)
        img_b = img_ref.at[b]        # (P, Dp) ref view

        def chunk_body(ci, coef):
            off = pl.multiple_of(ci * i_chunk, i_chunk)       # 128-lane aligned
            fwd_c = fwd_ref[:, pl.ds(off, i_chunk)]           # (Cc, ck) mm
            fwh_c = fwh_b[:, pl.ds(off, i_chunk)]             # (P,  ck) mm
            v_c = v_ref[:, pl.ds(off, i_chunk)]               # (1,  ck) f32
            # Folded fc_3/fc_a: coef[c,q] += sum_i tanh(fwd[c,i]*fwh[q,i])*v[i]
            t = jnp.tanh(fwd_c[:, None, :] * fwh_c[None, :, :])   # (Cc, P, ck)
            # bf16 * f32 promotes to f32 -> f32 accumulation of the reduce.
            return coef + jnp.sum(t * v_c, axis=-1)               # (Cc, P) f32

        coef = lax.fori_loop(0, n_chunks, chunk_body,
                             jnp.zeros((cc, p), jnp.float32))

        # Softmax over spatial positions (per-row fc_3/fc_a bias constant was
        # dropped in the wrapper: softmax-invariant).
        m = jnp.max(coef, axis=-1, keepdims=True)
        e = jnp.exp(coef - m)
        w = e * pl.reciprocal(jnp.sum(e, axis=-1, keepdims=True), approx=True)

        # Attention-weighted pooling of the image features (the bmm).
        out_ref[b] = jnp.dot(
            w.astype(mm_dtype), img_b[...],
            preferred_element_type=jnp.float32).astype(out_ref.dtype)
        return carry

    lax.fori_loop(0, bt, per_image, 0)


# --------------------------------------------------------------------------- #
# Wrapper / tiling derivation
# --------------------------------------------------------------------------- #

def _round_up(x, m):
    return ((x + m - 1) // m) * m


def _divisors_desc(n, cap):
    cap = max(1, min(n, cap))
    return [d for d in range(cap, 0, -1) if n % d == 0]


def _supports_single_buffered_weights():
    """Static capability check (no live-kernel try/except): pipeline_mode plus
    pl.Buffered are required to single-buffer constant-index weight specs."""
    if not hasattr(pl, "Buffered"):
        return False
    try:
        if "pipeline_mode" not in inspect.signature(pl.BlockSpec).parameters:
            return False
        pl.BlockSpec((8, 128), lambda i: (0, 0), pipeline_mode=pl.Buffered(1))
        return True
    except Exception:
        return False


def _vmem_capacity_bytes():
    # Narrow hardware query with a conservative (v7x, 64 MiB) fallback. This is
    # a capability probe only; kernel compile/runtime errors are never hidden.
    try:
        return int(pltpu.get_tpu_info().vmem_capacity_bytes)
    except Exception:
        return 64 * 1024 * 1024


def _estimate_vmem_bytes(bb, bc, P, Dp, Dw, Ip, i_chunk, mm_size, w_nbuf):
    """Rough per-step resident set: pipelined blocks + scratch + temporaries."""
    f32 = 4
    r8 = lambda x: _round_up(x, 8)
    r128 = lambda x: _round_up(x, 128)
    img = bb * r8(P) * Dp * mm_size * 2                  # double-buffered input
    word = r8(bc) * r128(Dw) * f32 * 2
    w1 = Dp * Ip * mm_size * w_nbuf
    w2 = r8(Dw) * Ip * mm_size * w_nbuf
    vv = 8 * Ip * f32 * w_nbuf
    out = bb * r8(bc) * Dp * f32 * 2
    fwh = bb * r8(P) * Ip * mm_size                      # fc_1 cache (scratch)
    fwd = r8(bc) * Ip * mm_size                          # fc_2 scratch
    work = (r8(bc) * r8(P) * i_chunk * (mm_size + f32)   # tanh chunk + f32 prod
            + r8(P) * Ip * f32                           # fc_1 f32 result tile
            + 4 * r8(bc) * r8(P) * f32                   # coef / softmax temps
            + r8(bc) * Dp * f32)                         # pooled tile
    return img + word + w1 + w2 + vv + out + fwh + fwd + work


def semantic_forward(img_nchw, word_features, w1, w2, w3, b3, wa_row, ba,
                     *, matmul_dtype=jnp.bfloat16, block_b=None, block_c=None,
                     i_chunk=None):
    """img_nchw: (B, D_img, S, S); word_features: (C, D_word) -> (B, C, D_img).

    matmul_dtype is the dtype of the MXU operands, the image block, the fwh
    cache and the tanh stage (f32 accumulation everywhere). Use jnp.float32 on
    v5e (no bf16 VPU/EUP path); jnp.bfloat16 on v6e/v7x."""
    del b3, ba  # folded fc_3/fc_a constant is softmax-invariant -> dropped
    B, D, S, _ = img_nchw.shape
    P = S * S
    C, Dw = word_features.shape
    I = w1.shape[1]
    mm_size = jnp.dtype(matmul_dtype).itemsize

    # ---- algebraic fold of fc_3 / fc_a (exact) -----------------------------
    # fc_a(fc_3(t)) = t @ (w3 @ wa^T) + (b3 @ wa^T + ba); the constant is
    # identical across each softmax row, so it is dropped.
    v = (w3 @ wa_row.reshape(I, 1)).reshape(1, I).astype(jnp.float32)

    # ---- lane-dense zero-padding of the 128-lane dims (exact) --------------
    Dp = _round_up(D, 128)
    Ip = _round_up(I, 128)
    img3d = jnp.transpose(img_nchw, (0, 2, 3, 1)).reshape(B, P, D)
    img3d = jnp.pad(img3d, ((0, 0), (0, 0), (0, Dp - D))).astype(matmul_dtype)
    w1p = jnp.pad(w1, ((0, Dp - D), (0, Ip - I))).astype(matmul_dtype)
    w2p = jnp.pad(w2, ((0, 0), (0, Ip - I))).astype(matmul_dtype)
    vp = jnp.pad(v, ((0, 0), (0, Ip - I)))
    wordf = word_features.astype(jnp.float32)

    # ---- I-reduction chunk (multiple of 128 that divides Ip) ---------------
    if i_chunk is None:
        i_chunk = next(c for c in (512, 384, 256, 128) if Ip % c == 0)
    assert Ip % i_chunk == 0 and i_chunk % 128 == 0

    single_buf = _supports_single_buffered_weights()
    w_nbuf = 1 if single_buf else 2

    # ---- per-generation tile derivation + explicit VMEM budget -------------
    capacity = _vmem_capacity_bytes()
    budget = int(0.70 * capacity)
    # f32 matmul path (v5e) doubles every temporary -> smaller tile caps.
    cap_b = 4 if mm_size >= 4 else 8
    cap_c = 8 if mm_size >= 4 else 16

    bc_cands = [d for d in _divisors_desc(C, cap_c) if d == C or d % 8 == 0]
    if not bc_cands:
        bc_cands = [C]          # full class dim keeps the (8,128) BlockSpec rule
    bb_cands = _divisors_desc(B, cap_b)
    if block_c is not None:
        bc_cands = [block_c]
    if block_b is not None:
        bb_cands = [block_b]

    chosen = None
    for bc in bc_cands:
        for bb in bb_cands:
            if _estimate_vmem_bytes(bb, bc, P, Dp, Dw, Ip, i_chunk,
                                    mm_size, w_nbuf) <= budget:
                chosen = (bb, bc)
                break
        if chosen is not None:
            break
    if chosen is None:          # smallest candidate tiles; fail loudly if OOM
        chosen = (bb_cands[-1], bc_cands[-1])
    bb, bc = chosen
    assert B % bb == 0 and C % bc == 0

    est = _estimate_vmem_bytes(bb, bc, P, Dp, Dw, Ip, i_chunk, mm_size, w_nbuf)
    vmem_limit = int(min(0.85 * capacity, max(1.5 * est, 32 * 1024 * 1024)))

    # Constant-index weight specs gain nothing from double buffering.
    wkw = {"pipeline_mode": pl.Buffered(1)} if single_buf else {}

    kernel = functools.partial(semantic_kernel, i_chunk=i_chunk)
    out = pl.pallas_call(
        kernel,
        out_shape=jax.ShapeDtypeStruct((B, C, Dp), jnp.float32),
        grid_spec=pltpu.PrefetchScalarGridSpec(
            num_scalar_prefetch=0,
            grid=(B // bb, C // bc),     # class axis innermost (fwh cache)
            in_specs=[
                pl.BlockSpec((bb, P, Dp), lambda bi, ci: (bi, 0, 0)),   # image
                pl.BlockSpec((bc, Dw), lambda bi, ci: (ci, 0)),         # word
                pl.BlockSpec((Dp, Ip), lambda bi, ci: (0, 0), **wkw),   # fc_1 W
                pl.BlockSpec((Dw, Ip), lambda bi, ci: (0, 0), **wkw),   # fc_2 W
                pl.BlockSpec((1, Ip), lambda bi, ci: (0, 0), **wkw),    # folded v
            ],
            out_specs=pl.BlockSpec((bb, bc, Dp), lambda bi, ci: (bi, ci, 0)),
            scratch_shapes=[
                pltpu.VMEM((bb, P, Ip), matmul_dtype),   # fc_1 cache
                pltpu.VMEM((bc, Ip), matmul_dtype),      # fc_2 tile
            ],
        ),
        compiler_params=pltpu.CompilerParams(
            # Batch axis may be megacore-split (v7x); the class axis MUST stay
            # "arbitrary" and innermost for the fwh cache to be valid.
            dimension_semantics=("parallel", "arbitrary"),
            vmem_limit_bytes=vmem_limit),
    )(img3d, wordf, w1p, w2p, vp)
    return out[..., :D]


def semantic_reference(img_nchw, word_features, w1, w2, w3, b3, wa_row, ba):
    """Pure-JAX port of the PyTorch forward (for verification)."""
    B, D, S, _ = img_nchw.shape
    P = S * S
    C = word_features.shape[0]
    I = w1.shape[1]
    f_wh = jnp.transpose(img_nchw, (0, 2, 3, 1)).reshape(B * P, D) @ w1     # (B*P, I)
    f_wd = (word_features @ w2).reshape(C, 1, I)                            # (C, 1, I)
    lb = jnp.tanh(f_wd * f_wh).reshape(-1, I) @ w3 + b3                     # (C*B*P, I)
    coef = lb @ wa_row.reshape(I, 1) + ba                                   # (C*B*P, 1)
    coef = coef.reshape(C, B, P).transpose(1, 0, 2)                         # (B, C, P)
    coef = jax.nn.softmax(coef, axis=2)
    img_flat = jnp.transpose(img_nchw, (0, 2, 3, 1)).reshape(B, P, D)
    return jnp.einsum('bcp,bpd->bcd', coef, img_flat)


if __name__ == "__main__":
    # Small, module-consistent shapes.
    batch_size = 2
    num_classes = 4
    image_feature_dim = 32
    word_feature_dim = 16
    intermediary_dim = 64
    convsize = 4

    key = jax.random.PRNGKey(0)
    k_img, k_word, k1, k2, k3, kb3, ka, kba = jax.random.split(key, 8)

    img_feature_map = jax.random.normal(
        k_img, (batch_size, image_feature_dim, convsize, convsize), jnp.float32)
    word_features = jax.random.normal(
        k_word, (num_classes, word_feature_dim), jnp.float32)

    # Deterministic parameter init (uniform +/- 1/sqrt(fan_in), PyTorch-style),
    # stored in (in, out) layout so forward is x @ W.
    def lin_init(k, fan_in, fan_out):
        bound = 1.0 / (fan_in ** 0.5)
        return jax.random.uniform(k, (fan_in, fan_out), jnp.float32, -bound, bound)

    w1 = lin_init(k1, image_feature_dim, intermediary_dim)     # fc_1 (no bias)
    w2 = lin_init(k2, word_feature_dim, intermediary_dim)      # fc_2 (no bias)
    w3 = lin_init(k3, intermediary_dim, intermediary_dim)      # fc_3 weight
    b3 = jax.random.uniform(kb3, (intermediary_dim,), jnp.float32,
                            -1.0 / intermediary_dim ** 0.5,
                            1.0 / intermediary_dim ** 0.5)     # fc_3 bias
    wa_row = lin_init(ka, intermediary_dim, 1).reshape(1, intermediary_dim)  # fc_a weight
    ba = jax.random.uniform(kba, (), jnp.float32,
                            -1.0 / intermediary_dim ** 0.5,
                            1.0 / intermediary_dim ** 0.5)     # fc_a bias

    ref = semantic_reference(img_feature_map, word_features, w1, w2, w3, b3, wa_row, ba)

    # High-precision path (f32 MXU operands, f32 image/fwh): tight check of the
    # kernel logic (only fp reordering + approx softmax reciprocal differ).
    out_f32 = semantic_forward(img_feature_map, word_features, w1, w2, w3, b3,
                               wa_row, ba, matmul_dtype=jnp.float32)
    out_f32 = jax.block_until_ready(out_f32)
    assert out_f32.shape == (batch_size, num_classes, image_feature_dim)
    assert jnp.allclose(out_f32, ref, atol=5e-3, rtol=5e-3), "f32 path mismatch"

    # Performance path (bf16 image/weights/tanh stage, f32 accumulation).
    out_bf16 = semantic_forward(img_feature_map, word_features, w1, w2, w3, b3,
                                wa_row, ba, matmul_dtype=jnp.bfloat16)
    out_bf16 = jax.block_until_ready(out_bf16)
    assert out_bf16.shape == (batch_size, num_classes, image_feature_dim)
    assert jnp.allclose(out_bf16, ref, atol=5e-2, rtol=5e-2), "bf16 path mismatch"

    print("KERNEL_OK")
</pallas_src>

<mosaic_0001>
module attributes {stable_mosaic.version = 11 : i64} {
  func.func @semantic_kernel(%arg0: i32, %arg1: i32, %arg2: memref<2x16x128xf32, #tpu.memory_space<vmem>>, %arg3: memref<4x16xf32, #tpu.memory_space<vmem>>, %arg4: memref<128x128xf32, #tpu.memory_space<vmem>>, %arg5: memref<16x128xf32, #tpu.memory_space<vmem>>, %arg6: memref<1x128xf32, #tpu.memory_space<vmem>>, %arg7: memref<2x4x128xf32, #tpu.memory_space<vmem>>, %arg8: memref<2x16x128xf32, #tpu.memory_space<vmem>>, %arg9: memref<4x128xf32, #tpu.memory_space<vmem>>) attributes {dimension_semantics = [#tpu.dimension_semantics<parallel>, #tpu.dimension_semantics<arbitrary>], iteration_bounds = array<i64: 1, 1>, scalar_prefetch = 0 : i64, scratch_operands = 2 : i64, tpu.core_type = #tpu.core_type<tc>, window_params = [{transform_indices = @transform_0, window_bounds = array<i64: 2, 16, 128>}, {transform_indices = @transform_1, window_bounds = array<i64: 4, 16>}, {pipeline_mode = #tpu.pipeline_mode<synchronous>, transform_indices = @transform_2, window_bounds = array<i64: 128, 128>}, {pipeline_mode = #tpu.pipeline_mode<synchronous>, transform_indices = @transform_3, window_bounds = array<i64: 16, 128>}, {pipeline_mode = #tpu.pipeline_mode<synchronous>, transform_indices = @transform_4, window_bounds = array<i64: 1, 128>}, {transform_indices = @transform_5, window_bounds = array<i64: 2, 4, 128>}]} {
    %c0_i32 = arith.constant 0 : i32
    %0 = arith.cmpi eq, %arg1, %c0_i32 : i32
    %1 = arith.extui %0 : i1 to i32
    %c0_i32_0 = arith.constant 0 : i32
    %2 = arith.cmpi ne, %1, %c0_i32_0 : i32
    scf.if %2 {
      %c0_i32_8 = arith.constant 0 : i32
      %c2_i32_9 = arith.constant 2 : i32
      %8 = arith.addi %c0_i32_8, %c2_i32_9 : i32
      %c1_i32_10 = arith.constant 1 : i32
      scf.for %arg10 = %c0_i32_8 to %8 step %c1_i32_10  : i32 {
        %9 = arith.index_cast %arg10 : i32 to index
        %c0_12 = arith.constant 0 : index
        %c0_13 = arith.constant 0 : index
        %10 = vector.load %arg2[%9, %c0_12, %c0_13] : memref<2x16x128xf32, #tpu.memory_space<vmem>>, vector<1x16x128xf32>
        %11 = vector.shape_cast %10 : vector<1x16x128xf32> to vector<16x128xf32>
        %c0_14 = arith.constant 0 : index
        %c0_15 = arith.constant 0 : index
        %12 = vector.load %arg4[%c0_14, %c0_15] : memref<128x128xf32, #tpu.memory_space<vmem>>, vector<128x128xf32>
        %cst_16 = arith.constant dense<0.000000e+00> : vector<16x128xf32>
        %13 = tpu.matmul %11, %12, %cst_16 {dimension_numbers = #tpu.dot_dimension_numbers<[1], [0], [0], [1], [0, 0, 1, 1], [], []>} : vector<16x128xf32>, vector<128x128xf32>, vector<16x128xf32> -> vector<16x128xf32>
        %14 = arith.index_cast %arg10 : i32 to index
        %c0_17 = arith.constant 0 : index
        %c0_18 = arith.constant 0 : index
        %15 = vector.load %arg8[%14, %c0_17, %c0_18] : memref<2x16x128xf32, #tpu.memory_space<vmem>>, vector<1x16x128xf32>
        %16 = vector.shape_cast %15 : vector<1x16x128xf32> to vector<16x128xf32>
        %17 = vector.shape_cast %13 : vector<16x128xf32> to vector<1x16x128xf32>
        tpu.vector_store %arg8[%14, %c0_17, %c0_18], %17 {strides = array<i32>} : memref<2x16x128xf32, #tpu.memory_space<vmem>>, vector<1x16x128xf32>,
      }
      %c2_i32_11 = arith.constant 2 : i32
    } else {
    }
    %c0 = arith.constant 0 : index
    %c0_1 = arith.constant 0 : index
    %3 = vector.load %arg3[%c0, %c0_1] : memref<4x16xf32, #tpu.memory_space<vmem>>, vector<4x16xf32>
    %c0_2 = arith.constant 0 : index
    %c0_3 = arith.constant 0 : index
    %4 = vector.load %arg5[%c0_2, %c0_3] : memref<16x128xf32, #tpu.memory_space<vmem>>, vector<16x128xf32>
    %cst = arith.constant dense<0.000000e+00> : vector<4x128xf32>
    %5 = tpu.matmul %3, %4, %cst {dimension_numbers = #tpu.dot_dimension_numbers<[1], [0], [0], [1], [0, 0, 1, 1], [], []>} : vector<4x16xf32>, vector<16x128xf32>, vector<4x128xf32> -> vector<4x128xf32>
    %c0_4 = arith.constant 0 : index
    %c0_5 = arith.constant 0 : index
    %6 = vector.load %arg9[%c0_4, %c0_5] : memref<4x128xf32, #tpu.memory_space<vmem>>, vector<4x128xf32>
    tpu.vector_store %arg9[%c0_4, %c0_5], %5 {strides = array<i32>} : memref<4x128xf32, #tpu.memory_space<vmem>>, vector<4x128xf32>,
    %c0_i32_6 = arith.constant 0 : i32
    %c2_i32 = arith.constant 2 : i32
    %7 = arith.addi %c0_i32_6, %c2_i32 : i32
    %c1_i32 = arith.constant 1 : i32
    scf.for %arg10 = %c0_i32_6 to %7 step %c1_i32  : i32 {
      %cst_8 = arith.constant 0.000000e+00 : f32
      %8 = vector.broadcast %cst_8 : f32 to vector<4x16xf32>
      %c0_i32_9 = arith.constant 0 : i32
      %c128_i32 = arith.constant 128 : i32
      %9 = arith.muli %c0_i32_9, %c128_i32 : i32
      %10 = tpu.assume_multiple %9, 128 : i32
      %c0_10 = arith.constant 0 : index
      %11 = arith.index_cast %10 : i32 to index
      %12 = vector.load %arg9[%c0_10, %11] : memref<4x128xf32, #tpu.memory_space<vmem>>, vector<4x128xf32>
      %c0_i32_11 = arith.constant 0 : i32
      %c0_i32_12 = arith.constant 0 : i32
      %13 = tpu.memref_slice %arg8[%arg10, %c0_i32_11, %c0_i32_12] : memref<2x16x128xf32, #tpu.memory_space<vmem>> -> memref<1x16x128xf32, #tpu.memory_space<vmem>>
      %14 = tpu.memref_squeeze %13 : memref<1x16x128xf32, #tpu.memory_space<vmem>> -> memref<16x128xf32, #tpu.memory_space<vmem>>
      %c0_13 = arith.constant 0 : index
      %15 = arith.index_cast %10 : i32 to index
      %16 = vector.load %14[%c0_13, %15] : memref<16x128xf32, #tpu.memory_space<vmem>>, vector<16x128xf32>
      %c0_14 = arith.constant 0 : index
      %17 = arith.index_cast %10 : i32 to index
      %18 = vector.load %arg6[%c0_14, %17] : memref<1x128xf32, #tpu.memory_space<vmem>>, vector<1x128xf32>
      %19 = vector.shape_cast %12 : vector<4x128xf32> to vector<4x1x128xf32>
      %20 = vector.shape_cast %16 : vector<16x128xf32> to vector<1x16x128xf32>
      %21 = vector.broadcast %19 : vector<4x1x128xf32> to vector<4x16x128xf32>
      %22 = vector.broadcast %20 : vector<1x16x128xf32> to vector<4x16x128xf32>
      %23 = arith.mulf %21, %22 : vector<4x16x128xf32>
      %24 = math.tanh %23 : vector<4x16x128xf32>
      %25 = vector.shape_cast %18 : vector<1x128xf32> to vector<1x1x128xf32>
      %26 = vector.broadcast %25 : vector<1x1x128xf32> to vector<4x16x128xf32>
      %27 = arith.mulf %24, %26 : vector<4x16x128xf32>
      %cst_15 = arith.constant dense<0.000000e+00> : vector<4x16xf32>
      %28 = vector.multi_reduction <add>, %27, %cst_15 [2] : vector<4x16x128xf32> to vector<4x16xf32>
      %29 = arith.addf %8, %28 : vector<4x16xf32>
      %c1_i32_16 = arith.constant 1 : i32
      %cst_17 = arith.constant dense<0xFF800000> : vector<4xf32>
      %30 = vector.multi_reduction <maximumf>, %29, %cst_17 [1] : vector<4x16xf32> to vector<4xf32>
      %31 = vector.shape_cast %30 : vector<4xf32> to vector<4x1xf32>
      %32 = vector.broadcast %31 : vector<4x1xf32> to vector<4x16xf32>
      %33 = arith.subf %29, %32 : vector<4x16xf32>
      %34 = math.exp %33 : vector<4x16xf32>
      %cst_18 = arith.constant dense<0.000000e+00> : vector<4xf32>
      %35 = vector.multi_reduction <add>, %34, %cst_18 [1] : vector<4x16xf32> to vector<4xf32>
      %36 = vector.shape_cast %35 : vector<4xf32> to vector<4x1xf32>
      %37 = tpu.reciprocal %36 {approx = true} : vector<4x1xf32> -> vector<4x1xf32>
      %38 = vector.broadcast %37 : vector<4x1xf32> to vector<4x16xf32>
      %39 = arith.mulf %34, %38 : vector<4x16xf32>
      %40 = arith.index_cast %arg10 : i32 to index
      %c0_19 = arith.constant 0 : index
      %c0_20 = arith.constant 0 : index
      %41 = vector.load %arg2[%40, %c0_19, %c0_20] : memref<2x16x128xf32, #tpu.memory_space<vmem>>, vector<1x16x128xf32>
      %42 = vector.shape_cast %41 : vector<1x16x128xf32> to vector<16x128xf32>
      %cst_21 = arith.constant dense<0.000000e+00> : vector<4x128xf32>
      %43 = tpu.matmul %39, %42, %cst_21 {dimension_numbers = #tpu.dot_dimension_numbers<[1], [0], [0], [1], [0, 0, 1, 1], [], []>} : vector<4x16xf32>, vector<16x128xf32>, vector<4x128xf32> -> vector<4x128xf32>
      %44 = arith.index_cast %arg10 : i32 to index
      %c0_22 = arith.constant 0 : index
      %c0_23 = arith.constant 0 : index
      %45 = vector.load %arg7[%44, %c0_22, %c0_23] : memref<2x4x128xf32, #tpu.memory_space<vmem>>, vector<1x4x128xf32>
      %46 = vector.shape_cast %45 : vector<1x4x128xf32> to vector<4x128xf32>
      %47 = vector.shape_cast %43 : vector<4x128xf32> to vector<1x4x128xf32>
      tpu.vector_store %arg7[%44, %c0_22, %c0_23], %47 {strides = array<i32>} : memref<2x4x128xf32, #tpu.memory_space<vmem>>, vector<1x4x128xf32>,
    }
    %c2_i32_7 = arith.constant 2 : i32
    return
  }
  func.func @transform_0(%arg0: i32, %arg1: i32) -> (i32, i32, i32) {
    %c0_i32 = arith.constant 0 : i32
    %c0_i32_0 = arith.constant 0 : i32
    %c0_i32_1 = arith.constant 0 : i32
    return %arg0, %c0_i32, %c0_i32_0 : i32, i32, i32
  }
  func.func @transform_1(%arg0: i32, %arg1: i32) -> (i32, i32) {
    %c0_i32 = arith.constant 0 : i32
    %c0_i32_0 = arith.constant 0 : i32
    return %arg1, %c0_i32 : i32, i32
  }
  func.func @transform_2(%arg0: i32, %arg1: i32) -> (i32, i32) {
    %c0_i32 = arith.constant 0 : i32
    %c0_i32_0 = arith.constant 0 : i32
    %c0_i32_1 = arith.constant 0 : i32
    return %c0_i32, %c0_i32_0 : i32, i32
  }
  func.func @transform_3(%arg0: i32, %arg1: i32) -> (i32, i32) {
    %c0_i32 = arith.constant 0 : i32
    %c0_i32_0 = arith.constant 0 : i32
    %c0_i32_1 = arith.constant 0 : i32
    return %c0_i32, %c0_i32_0 : i32, i32
  }
  func.func @transform_4(%arg0: i32, %arg1: i32) -> (i32, i32) {
    %c0_i32 = arith.constant 0 : i32
    %c0_i32_0 = arith.constant 0 : i32
    %c0_i32_1 = arith.constant 0 : i32
    return %c0_i32, %c0_i32_0 : i32, i32
  }
  func.func @transform_5(%arg0: i32, %arg1: i32) -> (i32, i32, i32) {
    %c0_i32 = arith.constant 0 : i32
    %c0_i32_0 = arith.constant 0 : i32
    return %arg0, %arg1, %c0_i32 : i32, i32, i32
  }
}

</mosaic_0001>

<llo_original>
// kernel: tpu_custom_call.1
$region0: #{tpu_custom_call.1}
  #allocation0 [shape = 'u32[]', space=smem, size = 0x4, offset = 0x4, fixed_abs, tag = 'smem constant byte address 0x4 - core index']
  #allocation1 [shape = 'u32[144,128]{1,0:T(1,128)}', space=vmem, size = 0x12000, scoped, tag = 'internal scratch']
  #allocation2 [shape = 'f32[2,16,128]{2,1,0:T(8,128)}', space=vmem, size = 0x4000, scoped, tag = 'scratch operand']
  #allocation3 [shape = 'f32[4,128]{1,0:T(4,128)}', space=vmem, size = 0x800, scoped, tag = 'scratch operand']
  %s0 = inlined_call_operand.hbm [shape: f32[2,16,128], index: 0, kind: input, shape index: {}]
  %s1 = inlined_call_operand.hbm [shape: f32[4,16], index: 1, kind: input, shape index: {}]
  %s2 = inlined_call_operand.hbm [shape: f32[128,128], index: 2, kind: input, shape index: {}]
  %s3 = inlined_call_operand.hbm [shape: f32[16,128], index: 3, kind: input, shape index: {}]
  %s4 = inlined_call_operand.vmem [shape: f32[1,128], index: 4, kind: input, shape index: {}]
  %s5 = inlined_call_operand.hbm [shape: f32[2,4,128], index: 5, kind: output, shape index: {}]
  %s6 = sld [smem:[#allocation0]]
  $region64: #{tpu_custom_call.1} parent=0
    _
  %s8 = ssub.s32 1, %s6
  %s9 = scalar_select 0, %s8, %s6
  $region1: #{tpu_custom_call.1} parent=0
    #allocation4 [shape = 'u8[16384]{0}', space=vmem, size = 0x4000, scoped, tag = 'input window, operand 0, single buffered']
    #allocation5 [shape = 's32[1]{0}', space=sflag, size = 0x4, scoped, tag = 'scoped memory for tpu_custom_call.1']
    #allocation6 [shape = 's32[1]{0}', space=sflag, size = 0x4, scoped, tag = 'scoped memory for tpu_custom_call.1']
    #allocation7 [shape = 'u8[2048]{0}', space=vmem, size = 0x800, scoped, tag = 'input window, operand 1, single buffered']
    #allocation8 [shape = 's32[1]{0}', space=sflag, size = 0x4, scoped, tag = 'scoped memory for tpu_custom_call.1']
    #allocation9 [shape = 'u8[65536]{0}', space=vmem, size = 0x10000, scoped, tag = 'input window, operand 2, single buffered']
    #allocation10 [shape = 'u8[8192]{0}', space=vmem, size = 0x2000, scoped, tag = 'input window, operand 3, single buffered']
    #allocation11 [shape = 's32[1]{0}', space=sflag, size = 0x4, scoped, tag = 'scoped memory for tpu_custom_call.1']
    #allocation12 [shape = 'u8[4096]{0}', space=vmem, size = 0x1000, scoped, tag = 'output window, operand 0, single buffered']
    %10 = vsyncpa [#allocation5], 0
    %11 = vsyncpa [#allocation8], 0
    %12 = vsyncpa [#allocation11], 0
    %13 = vsyncpa [#allocation6], 0
    // Predicated region
    $region2: #{tpu_custom_call.1} parent=1 // pred_check
      _
    $region3: #{tpu_custom_call.1} parent=1 // pred_check_branch
      %15 = sbr.rel (0) target = $region5
    $region4: #{tpu_custom_call.1} parent=1 // pred_region
      %s17 = ssub.s32 512, 512
      %18 = vsyncadd [#allocation5], %s17
      %s19 = sshll.u32 [#allocation4], 4
      %s20 = int_to_ptr.vmem [resolvable:$true] %s19
      %25 = dma.hbm_to_vmem [thread:$0]  %s0, 512, %s20, [#allocation5], 128, 128, 8
    $region5: #{tpu_custom_call.1} parent=1 // pred_fallthru
      _
    // Predicated region
    $region6: #{tpu_custom_call.1} parent=1 // pred_check
      _
    $region7: #{tpu_custom_call.1} parent=1 // pred_check_branch
      %27 = sbr.rel (0) target = $region9
    $region8: #{tpu_custom_call.1} parent=1 // pred_region
      %s29 = ssub.s32 64, 64
      %30 = vsyncadd [#allocation8], %s29
      %s32 = sshll.u32 [#allocation7], 4
      %s33 = int_to_ptr.vmem [resolvable:$true] %s32
      %35 = dma.hbm_to_vmem [thread:$0]  %s1, 64, %s33, [#allocation8]
    $region9: #{tpu_custom_call.1} parent=1 // pred_fallthru
      _
    // Predicated region
    $region10: #{tpu_custom_call.1} parent=1 // pred_check
      _
    $region11: #{tpu_custom_call.1} parent=1 // pred_check_branch
      %37 = sbr.rel (0) target = $region13
    $region12: #{tpu_custom_call.1} parent=1 // pred_region
      %s39 = ssub.s32 2048, 2048
      %40 = vsyncadd [#allocation8], %s39
      %s41 = sshll.u32 [#allocation9], 4
      %s42 = int_to_ptr.vmem [resolvable:$true] %s41
      %47 = dma.hbm_to_vmem [thread:$0]  %s2, 2048, %s42, [#allocation8], 128, 128, 8
    $region13: #{tpu_custom_call.1} parent=1 // pred_fallthru
      _
    // Predicated region
    $region14: #{tpu_custom_call.1} parent=1 // pred_check
      _
    $region15: #{tpu_custom_call.1} parent=1 // pred_check_branch
      %49 = sbr.rel (0) target = $region17
    $region16: #{tpu_custom_call.1} parent=1 // pred_region
      %s51 = ssub.s32 256, 256
      %52 = vsyncadd [#allocation11], %s51
      %s53 = sshll.u32 [#allocation10], 4
      %s54 = int_to_ptr.vmem [resolvable:$true] %s53
      %59 = dma.hbm_to_vmem [thread:$0]  %s3, 256, %s54, [#allocation11], 128, 128, 8
    $region17: #{tpu_custom_call.1} parent=1 // pred_fallthru
      _
    // Predicated region
    $region18: #{tpu_custom_call.1} parent=1 // pred_check
      _
    $region19: #{tpu_custom_call.1} parent=1 // pred_check_branch
      %61 = sbr.rel (0) target = $region21
    $region20: #{tpu_custom_call.1} parent=1 // pred_region
      _
    $region21: #{tpu_custom_call.1} parent=1 // pred_fallthru
      _
    // Predicated region
    $region22: #{tpu_custom_call.1} parent=1 // pred_check
      _
    $region23: #{tpu_custom_call.1} parent=1 // pred_check_branch
      %63 = sbr.rel (0) target = $region25
    $region24: #{tpu_custom_call.1} parent=1 // pred_region
      %64 = dma.done [#allocation5], 512
    $region25: #{tpu_custom_call.1} parent=1 // pred_fallthru
      _
    // Predicated region
    $region26: #{tpu_custom_call.1} parent=1 // pred_check
      _
    $region27: #{tpu_custom_call.1} parent=1 // pred_check_branch
      %66 = sbr.rel (0) target = $region29
    $region28: #{tpu_custom_call.1} parent=1 // pred_region
      %67 = dma.done [#allocation8], 64
    $region29: #{tpu_custom_call.1} parent=1 // pred_fallthru
      _
    // Predicated region
    $region30: #{tpu_custom_call.1} parent=1 // pred_check
      _
    $region31: #{tpu_custom_call.1} parent=1 // pred_check_branch
      %69 = sbr.rel (0) target = $region33
    $region32: #{tpu_custom_call.1} parent=1 // pred_region
      %70 = dma.done [#allocation8], 2048
    $region33: #{tpu_custom_call.1} parent=1 // pred_fallthru
      _
    // Predicated region
    $region34: #{tpu_custom_call.1} parent=1 // pred_check
      _
    $region35: #{tpu_custom_call.1} parent=1 // pred_check_branch
      %72 = sbr.rel (0) target = $region37
    $region36: #{tpu_custom_call.1} parent=1 // pred_region
      %73 = dma.done [#allocation11], 256
    $region37: #{tpu_custom_call.1} parent=1 // pred_fallthru
      _
    %p74 = scmp.eq.s32.totalorder 0, 0
    // Predicated region
    $region38: #{tpu_custom_call.1} parent=1 // pred_check
      %p75 = pneg %p74
    $region39: #{tpu_custom_call.1} parent=1 // pred_check_branch
      %77 = sbr.rel (%p75) target = $region41
    $region40: #{tpu_custom_call.1} parent=1 // pred_region
      loop: start=0, step=1, limit=2
      $region42: #{tpu_custom_call.1} parent=40 // loop_pre_header
        _
      $region43: #{tpu_custom_call.1} parent=40 // loop_header
        %s79 = sphi 0, %s83
        %p80 = scmp.ge.s32.totalorder %s79, 2
      $region44: #{tpu_custom_call.1} parent=40 // loop_header_branch
        %82 = sbr.rel (%p80) target = $region48
      $region45: #{tpu_custom_call.1} parent=40 // loop_body
        %s84 = smul.u32 %s79, 16
        %s85 = scalar_lea.vmem [#allocation4], %s84
        %v86 = vld [vmem:[%s85] sm:$0xff]
        %v87 = vld [vmem:[%s85 + $0x8] sm:$0xff]
        %v88 = vld [vmem:[#allocation9] sm:$0xff]
        %v89 = vld [vmem:[#allocation9 + $0x8] sm:$0xff]
        %v90 = vld [vmem:[#allocation9 + $0x10] sm:$0xff]
        %v91 = vld [vmem:[#allocation9 + $0x18] sm:$0xff]
        %v92 = vld [vmem:[#allocation9 + $0x20] sm:$0xff]
        %v93 = vld [vmem:[#allocation9 + $0x28] sm:$0xff]
        %v94 = vld [vmem:[#allocation9 + $0x30] sm:$0xff]
        %v95 = vld [vmem:[#allocation9 + $0x38] sm:$0xff]
        %v96 = vld [vmem:[#allocation9 + $0x40] sm:$0xff]
        %v97 = vld [vmem:[#allocation9 + $0x48] sm:$0xff]
        %v98 = vld [vmem:[#allocation9 + $0x50] sm:$0xff]
        %v99 = vld [vmem:[#allocation9 + $0x58] sm:$0xff]
        %v100 = vld [vmem:[#allocation9 + $0x60] sm:$0xff]
        %v101 = vld [vmem:[#allocation9 + $0x68] sm:$0xff]
        %v102 = vld [vmem:[#allocation9 + $0x70] sm:$0xff]
        %v103 = vld [vmem:[#allocation9 + $0x78] sm:$0xff]
        %104 = vmatprep.subr.mxu0 0.0
        %105 = vmatpush1.msra.mxu0 %v103
        %106 = vmatprep.subr.mxu0 0.0
        %107 = vmatpush1.msra.mxu0 %v102
        %108 = vmatprep.subr.mxu0 0.0
        %109 = vmatpush1.msra.mxu0 %v101
        %110 = vmatprep.subr.mxu0 0.0
        %111 = vmatpush1.msra.mxu0 %v100
        %112 = vmatprep.subr.mxu0 0.0
        %113 = vmatpush1.msra.mxu0 %v99
        %114 = vmatprep.subr.mxu0 0.0
        %115 = vmatpush1.msra.mxu0 %v98
        %116 = vmatprep.subr.mxu0 0.0
        %117 = vmatpush1.msra.mxu0 %v97
        %118 = vmatprep.subr.mxu0 0.0
        %119 = vmatpush1.msra.mxu0 %v96
        %120 = vmatprep.subr.mxu0 0.0
        %121 = vmatpush1.msra.mxu0 %v95
        %122 = vmatprep.subr.mxu0 0.0
        %123 = vmatpush1.msra.mxu0 %v94
        %124 = vmatprep.subr.mxu0 0.0
        %125 = vmatpush1.msra.mxu0 %v93
        %126 = vmatprep.subr.mxu0 0.0
        %127 = vmatpush1.msra.mxu0 %v92
        %128 = vmatprep.subr.mxu0 0.0
        %129 = vmatpush1.msra.mxu0 %v91
        %130 = vmatprep.subr.mxu0 0.0
        %131 = vmatpush1.msra.mxu0 %v90
        %132 = vmatprep.subr.mxu0 0.0
        %133 = vmatpush1.msra.mxu0 %v89
        %134 = vmatprep.subr.mxu0 0.0
        %135 = vmatpush1.msra.mxu0 %v88
        %136 = vmatprep.subr.mxu0 0.0
        %137 = vmatpush2.msra.mxu0 0.0
        %138 = vmatprep.subr.mxu0 0.0
        %139 = vmatpush2.msra.mxu0 0.0
        %140 = vmatprep.subr.mxu0 0.0
        %141 = vmatpush2.msra.mxu0 0.0
        %142 = vmatprep.subr.mxu0 0.0
        %143 = vmatpush2.msra.mxu0 0.0
        %144 = vmatprep.subr.mxu0 0.0
        %145 = vmatpush2.msra.mxu0 0.0
        %146 = vmatprep.subr.mxu0 0.0
        %147 = vmatpush2.msra.mxu0 0.0
        %148 = vmatprep.subr.mxu0 0.0
        %149 = vmatpush2.msra.mxu0 0.0
        %150 = vmatprep.subr.mxu0 0.0
        %151 = vmatpush2.msra.mxu0 0.0
        %152 = vmatprep.subr.mxu0 0.0
        %153 = vmatpush2.msra.mxu0 0.0
        %154 = vmatprep.subr.mxu0 0.0
        %155 = vmatpush2.msra.mxu0 0.0
        %156 = vmatprep.subr.mxu0 0.0
        %157 = vmatpush2.msra.mxu0 0.0
        %158 = vmatprep.subr.mxu0 0.0
        %159 = vmatpush2.msra.mxu0 0.0
        %160 = vmatprep.subr.mxu0 0.0
        %161 = vmatpush2.msra.mxu0 0.0
        %162 = vmatprep.subr.mxu0 0.0
        %163 = vmatpush2.msra.mxu0 0.0
        %164 = vmatprep.subr.mxu0 0.0
        %165 = vmatpush2.msra.mxu0 0.0
        %166 = vmatprep.subr.mxu0 0.0
        %167 = vmatpush2.msra.mxu0 0.0
        %168 = vmatprep.mubr.f32.mxu0 0.0
        %169 = vmatmul.mubr.f32.gmra.mxu0 %v86
        %v170 = vpop.f32.mrf.mxu0
        %v171 = vadd.f32 0.0, %v170
        %v172 = vpop.f32.mrf.mxu0
        %173 = vmatprep.mubr.f32.mxu0 0.0
        %174 = vmatmul.mubr.f32.gmra.mxu0 %v87
        %v175 = vpop.f32.mrf.mxu0
        %v176 = vadd.f32 0.0, %v175
        %v177 = vpop.f32.mrf.mxu0
        %178 = vdwg.mxu0
        %s179 = scalar_lea.vmem [#allocation2], %s84
        %180 = vst [vmem:[%s179] sm:$0xff] %v171
        %181 = vst [vmem:[%s179 + $0x8] sm:$0xff] %v176
      $region46: #{tpu_custom_call.1} parent=40 // loop_footer
        %s83 = sadd.s32 1, %s79
      $region47: #{tpu_custom_call.1} parent=40 // loop_footer_branch
        %78 = sbr.rel target = $region43
      $region48: #{tpu_custom_call.1} parent=40 // loop_exit
        _
    $region41: #{tpu_custom_call.1} parent=1 // pred_fallthru
      _
    %v182 = vld [vmem:[#allocation7] sm:$0xf]
    %v183 = vld [vmem:[#allocation10] sm:$0xff]
    %v184 = vld [vmem:[#allocation10 + $0x8] sm:$0xff]
    %vm185 = vcmask 130048
    %v187 = vsel %vm185, %v182, 0
    %189 = vmatprep.subr.mxu0 0.0
    %190 = vmatpush1.msra.mxu0 0.0
    %191 = vmatprep.subr.mxu0 0.0
    %192 = vmatpush1.msra.mxu0 0.0
    %193 = vmatprep.subr.mxu0 0.0
    %194 = vmatpush1.msra.mxu0 0.0
    %195 = vmatprep.subr.mxu0 0.0
    %196 = vmatpush1.msra.mxu0 0.0
    %197 = vmatprep.subr.mxu0 0.0
    %198 = vmatpush1.msra.mxu0 0.0
    %199 = vmatprep.subr.mxu0 0.0
    %200 = vmatpush1.msra.mxu0 0.0
    %201 = vmatprep.subr.mxu0 0.0
    %202 = vmatpush1.msra.mxu0 0.0
    %203 = vmatprep.subr.mxu0 0.0
    %204 = vmatpush1.msra.mxu0 0.0
    %205 = vmatprep.subr.mxu0 0.0
    %206 = vmatpush1.msra.mxu0 0.0
    %207 = vmatprep.subr.mxu0 0.0
    %208 = vmatpush1.msra.mxu0 0.0
    %209 = vmatprep.subr.mxu0 0.0
    %210 = vmatpush1.msra.mxu0 0.0
    %211 = vmatprep.subr.mxu0 0.0
    %212 = vmatpush1.msra.mxu0 0.0
    %213 = vmatprep.subr.mxu0 0.0
    %214 = vmatpush1.msra.mxu0 0.0
    %215 = vmatprep.subr.mxu0 0.0
    %216 = vmatpush1.msra.mxu0 0.0
    %217 = vmatprep.subr.mxu0 0.0
    %218 = vmatpush1.msra.mxu0 %v184
    %219 = vmatprep.subr.mxu0 0.0
    %220 = vmatpush1.msra.mxu0 %v183
    %221 = vmatprep.subr.mxu0 0.0
    %222 = vmatpush2.msra.mxu0 0.0
    %223 = vmatprep.subr.mxu0 0.0
    %224 = vmatpush2.msra.mxu0 0.0
    %225 = vmatprep.subr.mxu0 0.0
    %226 = vmatpush2.msra.mxu0 0.0
    %227 = vmatprep.subr.mxu0 0.0
    %228 = vmatpush2.msra.mxu0 0.0
    %229 = vmatprep.subr.mxu0 0.0
    %230 = vmatpush2.msra.mxu0 0.0
    %231 = vmatprep.subr.mxu0 0.0
    %232 = vmatpush2.msra.mxu0 0.0
    %233 = vmatprep.subr.mxu0 0.0
    %234 = vmatpush2.msra.mxu0 0.0
    %235 = vmatprep.subr.mxu0 0.0
    %236 = vmatpush2.msra.mxu0 0.0
    %237 = vmatprep.subr.mxu0 0.0
    %238 = vmatpush2.msra.mxu0 0.0
    %239 = vmatprep.subr.mxu0 0.0
    %240 = vmatpush2.msra.mxu0 0.0
    %241 = vmatprep.subr.mxu0 0.0
    %242 = vmatpush2.msra.mxu0 0.0
    %243 = vmatprep.subr.mxu0 0.0
    %244 = vmatpush2.msra.mxu0 0.0
    %245 = vmatprep.subr.mxu0 0.0
    %246 = vmatpush2.msra.mxu0 0.0
    %247 = vmatprep.subr.mxu0 0.0
    %248 = vmatpush2.msra.mxu0 0.0
    %249 = vmatprep.subr.mxu0 0.0
    %250 = vmatpush2.msra.mxu0 0.0
    %251 = vmatprep.subr.mxu0 0.0
    %252 = vmatpush2.msra.mxu0 0.0
    %253 = vmatprep.mubr.f32.mxu0 0.0
    %254 = vmatmul.mubr.f32.gmra.mxu0 %v187
    %v255 = vpop.f32.mrf.mxu0
    %v256 = vadd.f32 0.0, %v255
    %v257 = vpop.f32.mrf.mxu0
    %258 = vdwg.mxu0
    %259 = vst [vmem:[#allocation3] sm:$0xf] %v256
    loop: start=0, step=1, limit=2
    $region49: #{tpu_custom_call.1} parent=1 // loop_pre_header
      _
    $region50: #{tpu_custom_call.1} parent=1 // loop_header
      %s261 = sphi 0, %s265
      %p262 = scmp.ge.s32.totalorder %s261, 2
    $region51: #{tpu_custom_call.1} parent=1 // loop_header_branch
      %264 = sbr.rel (%p262) target = $region55
    $region52: #{tpu_custom_call.1} parent=1 // loop_body
      %v266 = vld [vmem:[#allocation3] sm:$0xf]
      %s267 = smul.u32 %s261, 16
      %s268 = scalar_lea.vmem [#allocation2], %s267
      %v269 = vld [vmem:[%s268] sm:$0xff]
      %v270 = vld [vmem:[%s268 + $0x8] sm:$0xff]
      %v271 = vld [vmem:[%s4] sm:$0x1]
      %v274 = vunpack.c.l.s4 1966171168
      %v275 = vunpack.c.0.s8 %v274
      %v276 = vlaneseq
      %v277 = vshrl.u32 %v276, 7
      %v278 = vsub.s32 %v275, %v277
      %v279 = vrot.slane %v266, %v278
      %v280 = vcombine.high %v279, %v279
      %v282 = vunpack.c.l.s4 1966171168
      %v283 = vunpack.c.0.s8 %v282
      %v284 = vlaneseq
      %v285 = vshrl.u32 %v284, 7
      %v286 = vsub.s32 %v283, %v285
      %v287 = vrot.slane %v279, %v286
      %v289 = vunpack.c.l.s4 1966171168
      %v290 = vunpack.c.0.s8 %v289
      %v291 = vlaneseq
      %v292 = vshrl.u32 %v291, 7
      %v293 = vsub.s32 %v290, %v292
      %v294 = vrot.slane %v280, %v293
      %v295 = vcombine.high %v287, %v287
      %v296 = vcombine.high %v294, %v294
      %v297 = vlaneseq
      %v298 = vshrl.u32 %v297, 7
      %v299 = vsub.s32 0, %v298
      %v300 = vrot.slane %v287, %v299
      %v301 = vlaneseq
      %v302 = vshrl.u32 %v301, 7
      %v303 = vsub.s32 0, %v302
      %v304 = vrot.slane %v294, %v303
      %v305 = vlaneseq
      %v306 = vshrl.u32 %v305, 7
      %v307 = vsub.s32 0, %v306
      %v308 = vrot.slane %v295, %v307
      %v309 = vlaneseq
      %v310 = vshrl.u32 %v309, 7
      %v311 = vsub.s32 0, %v310
      %v312 = vrot.slane %v296, %v311
      %v317 = vmul.f32 %v300, %v269
      %v318 = vmul.f32 %v300, %v270
      %v319 = vmul.f32 %v304, %v269
      %v320 = vmul.f32 %v304, %v270
      %v321 = vmul.f32 %v308, %v269
      %v322 = vmul.f32 %v308, %v270
      %v323 = vmul.f32 %v312, %v269
      %v324 = vmul.f32 %v312, %v270
      %v325 = vtanh.pop %v317
      %v326 = vtanh.pop %v318
      %v327 = vtanh.pop %v319
      %v328 = vtanh.pop %v320
      %v329 = vtanh.pop %v321
      %v330 = vtanh.pop %v322
      %v331 = vtanh.pop %v323
      %v332 = vtanh.pop %v324
      %v334 = vlaneseq
      %v335 = vshrl.u32 %v334, 7
      %v336 = vsub.s32 0, %v335
      %v337 = vrot.slane %v271, %v336
      %v339 = vmul.f32 %v325, %v337
      %v340 = vmul.f32 %v326, %v337
      %v341 = vmul.f32 %v327, %v337
      %v342 = vmul.f32 %v328, %v337
      %v343 = vmul.f32 %v329, %v337
      %v344 = vmul.f32 %v330, %v337
      %v345 = vmul.f32 %v331, %v337
      %v346 = vmul.f32 %v332, %v337
      %347 = vadd.xlane.f32.xlu0 %v339
      %v348 = vpop.xlane.xlu0 %347
      %349 = vadd.xlane.f32.xlu0 %v340
      %v350 = vpop.xlane.xlu0 %349
      %351 = vadd.xlane.f32.xlu0 %v341
      %v352 = vpop.xlane.xlu0 %351
      %353 = vadd.xlane.f32.xlu0 %v342
      %v354 = vpop.xlane.xlu0 %353
      %355 = vadd.xlane.f32.xlu0 %v343
      %v356 = vpop.xlane.xlu0 %355
      %357 = vadd.xlane.f32.xlu0 %v344
      %v358 = vpop.xlane.xlu0 %357
      %359 = vadd.xlane.f32.xlu0 %v345
      %v360 = vpop.xlane.xlu0 %359
      %361 = vadd.xlane.f32.xlu0 %v346
      %v362 = vpop.xlane.xlu0 %361
      %v363 = vadd.f32 %v348, 0.0
      %v364 = vadd.f32 %v350, 0.0
      %v365 = vadd.f32 %v352, 0.0
      %v366 = vadd.f32 %v354, 0.0
      %v367 = vadd.f32 %v356, 0.0
      %v368 = vadd.f32 %v358, 0.0
      %v369 = vadd.f32 %v360, 0.0
      %v370 = vadd.f32 %v362, 0.0
      %v379 = vlaneseq
      %v380 = vand.u32 %v379, 127
      %v381 = vlaneseq
      %v382 = vshrl.u32 %v381, 7
      %v383 = vsub.s32 %v380, %v382
      %v384 = vrot.slane %v363, %v383
      %v385 = vadd.s32 %v380, 4294967288
      %v386 = vlaneseq
      %v387 = vshrl.u32 %v386, 7
      %v388 = vsub.s32 %v385, %v387
      %v389 = vrot.slane %v364, %v388
      %vm390 = vcmask 130112
      %v391 = vsel %vm390, %v389, %v384
      %v392 = vlaneseq
      %v393 = vshrl.u32 %v392, 7
      %v394 = vsub.s32 %v380, %v393
      %v395 = vrot.slane %v365, %v394
      %v396 = vlaneseq
      %v397 = vshrl.u32 %v396, 7
      %v398 = vsub.s32 %v385, %v397
      %v399 = vrot.slane %v366, %v398
      %v400 = vsel %vm390, %v399, %v395
      %v401 = vlaneseq
      %v402 = vshrl.u32 %v401, 7
      %v403 = vsub.s32 %v380, %v402
      %v404 = vrot.slane %v367, %v403
      %v405 = vlaneseq
      %v406 = vshrl.u32 %v405, 7
      %v407 = vsub.s32 %v385, %v406
      %v408 = vrot.slane %v368, %v407
      %v409 = vsel %vm390, %v408, %v404
      %v410 = vlaneseq
      %v411 = vshrl.u32 %v410, 7
      %v412 = vsub.s32 %v380, %v411
      %v413 = vrot.slane %v369, %v412
      %v414 = vlaneseq
      %v415 = vshrl.u32 %v414, 7
      %v416 = vsub.s32 %v385, %v415
      %v417 = vrot.slane %v370, %v416
      %v418 = vsel %vm390, %v417, %v413
      %vm419 = vcmask 1041409
      %v420 = vsel %vm419, %v400, %v391
      %vm421 = vcmask 1042434
      %v422 = vsel %vm421, %v409, %v420
      %vm423 = vcmask 1043459
      %v424 = vsel %vm423, %v418, %v422
      %vm426 = vcmask 125952
      %v427 = vsel %vm426, %v424, -inf
      %428 = vmax.xlane.f32.xlu0 %v427
      %v429 = vpop.xlane.xlu0 %428
      %v431 = vlaneseq
      %v432 = vshrl.u32 %v431, 7
      %v433 = vsub.s32 0, %v432
      %v434 = vrot.slane %v429, %v433
      %v435 = vlaneseq
      %v436 = vshrl.u32 %v435, 7
      %v437 = vsub.s32 1, %v436
      %v438 = vrot.slane %v429, %v437
      %v439 = vlaneseq
      %v440 = vshrl.u32 %v439, 7
      %v441 = vsub.s32 2, %v440
      %v442 = vrot.slane %v429, %v441
      %v443 = vlaneseq
      %v444 = vshrl.u32 %v443, 7
      %v445 = vsub.s32 3, %v444
      %v446 = vrot.slane %v429, %v445
      %v451 = vsub.f32 %v363, %v434
      %v452 = vsub.f32 %v364, %v434
      %v453 = vsub.f32 %v365, %v438
      %v454 = vsub.f32 %v366, %v438
      %v455 = vsub.f32 %v367, %v442
      %v456 = vsub.f32 %v368, %v442
      %v457 = vsub.f32 %v369, %v446
      %v458 = vsub.f32 %v370, %v446
      %v459 = vmul.f32 %v451, 1.442695
      %v460 = vpow.pop %v459
      %v461 = vmul.f32 %v452, 1.442695
      %v462 = vpow.pop %v461
      %v463 = vmul.f32 %v453, 1.442695
      %v464 = vpow.pop %v463
      %v465 = vmul.f32 %v454, 1.442695
      %v466 = vpow.pop %v465
      %v467 = vmul.f32 %v455, 1.442695
      %v468 = vpow.pop %v467
      %v469 = vmul.f32 %v456, 1.442695
      %v470 = vpow.pop %v469
      %v471 = vmul.f32 %v457, 1.442695
      %v472 = vpow.pop %v471
      %v473 = vmul.f32 %v458, 1.442695
      %v474 = vpow.pop %v473
      %483 = vset.pattern.permute.xlu0 0
      %484 = vperm.xlu0 %483, %v460
      %v485 = vpop.permute.xlu0 %484
      %486 = vset.pattern.permute.xlu0 0
      %487 = vperm.xlu0 %486, %v462
      %v488 = vpop.permute.xlu0 %487
      %489 = vset.pattern.permute.xlu0 0
      %490 = vperm.xlu0 %489, %v464
      %v491 = vpop.permute.xlu0 %490
      %492 = vset.pattern.permute.xlu0 0
      %493 = vperm.xlu0 %492, %v466
      %v494 = vpop.permute.xlu0 %493
      %495 = vset.pattern.permute.xlu0 0
      %496 = vperm.xlu0 %495, %v468
      %v497 = vpop.permute.xlu0 %496
      %498 = vset.pattern.permute.xlu0 0
      %499 = vperm.xlu0 %498, %v470
      %v500 = vpop.permute.xlu0 %499
      %501 = vset.pattern.permute.xlu0 0
      %502 = vperm.xlu0 %501, %v472
      %v503 = vpop.permute.xlu0 %502
      %504 = vset.pattern.permute.xlu0 0
      %505 = vperm.xlu0 %504, %v474
      %v506 = vpop.permute.xlu0 %505
      %v507 = vlaneseq
      %v508 = vshrl.u32 %v507, 7
      %v509 = vsub.s32 %v380, %v508
      %v510 = vrot.slane %v485, %v509
      %v511 = vlaneseq
      %v512 = vshrl.u32 %v511, 7
      %v513 = vsub.s32 %v385, %v512
      %v514 = vrot.slane %v488, %v513
      %v515 = vsel %vm390, %v514, %v510
      %v516 = vlaneseq
      %v517 = vshrl.u32 %v516, 7
      %v518 = vsub.s32 %v380, %v517
      %v519 = vrot.slane %v491, %v518
      %v520 = vlaneseq
      %v521 = vshrl.u32 %v520, 7
      %v522 = vsub.s32 %v385, %v521
      %v523 = vrot.slane %v494, %v522
      %v524 = vsel %vm390, %v523, %v519
      %v525 = vlaneseq
      %v526 = vshrl.u32 %v525, 7
      %v527 = vsub.s32 %v380, %v526
      %v528 = vrot.slane %v497, %v527
      %v529 = vlaneseq
      %v530 = vshrl.u32 %v529, 7
      %v531 = vsub.s32 %v385, %v530
      %v532 = vrot.slane %v500, %v531
      %v533 = vsel %vm390, %v532, %v528
      %v534 = vlaneseq
      %v535 = vshrl.u32 %v534, 7
      %v536 = vsub.s32 %v380, %v535
      %v537 = vrot.slane %v503, %v536
      %v538 = vlaneseq
      %v539 = vshrl.u32 %v538, 7
      %v540 = vsub.s32 %v385, %v539
      %v541 = vrot.slane %v506, %v540
      %v542 = vsel %vm390, %v541, %v537
      %v543 = vsel %vm419, %v524, %v515
      %v544 = vsel %vm421, %v533, %v543
      %v545 = vsel %vm423, %v542, %v544
      %v547 = vsel %vm426, %v545, 0.0
      %548 = vadd.xlane.f32.xlu0 %v547
      %v549 = vpop.xlane.xlu0 %548
      %v550 = vrcp.pop %v549
      %v552 = vlaneseq
      %v553 = vshrl.u32 %v552, 7
      %v554 = vsub.s32 0, %v553
      %v555 = vrot.slane %v550, %v554
      %v556 = vlaneseq
      %v557 = vshrl.u32 %v556, 7
      %v558 = vsub.s32 1, %v557
      %v559 = vrot.slane %v550, %v558
      %v560 = vlaneseq
      %v561 = vshrl.u32 %v560, 7
      %v562 = vsub.s32 2, %v561
      %v563 = vrot.slane %v550, %v562
      %v564 = vlaneseq
      %v565 = vshrl.u32 %v564, 7
      %v566 = vsub.s32 3, %v565
      %v567 = vrot.slane %v550, %v566
      %v572 = vmul.f32 %v460, %v555
      %v573 = vmul.f32 %v462, %v555
      %v574 = vmul.f32 %v464, %v559
      %v575 = vmul.f32 %v466, %v559
      %v576 = vmul.f32 %v468, %v563
      %v577 = vmul.f32 %v470, %v563
      %v578 = vmul.f32 %v472, %v567
      %v579 = vmul.f32 %v474, %v567
      %s580 = scalar_lea.vmem [#allocation4], %s267
      %v581 = vld [vmem:[%s580] sm:$0xff]
      %v582 = vld [vmem:[%s580 + $0x8] sm:$0xff]
      %591 = vset.pattern.permute.xlu0 0
      %592 = vperm.xlu0 %591, %v572
      %v593 = vpop.permute.xlu0 %592
      %594 = vset.pattern.permute.xlu0 0
      %595 = vperm.xlu0 %594, %v573
      %v596 = vpop.permute.xlu0 %595
      %597 = vset.pattern.permute.xlu0 0
      %598 = vperm.xlu0 %597, %v574
      %v599 = vpop.permute.xlu0 %598
      %600 = vset.pattern.permute.xlu0 0
      %601 = vperm.xlu0 %600, %v575
      %v602 = vpop.permute.xlu0 %601
      %603 = vset.pattern.permute.xlu0 0
      %604 = vperm.xlu0 %603, %v576
      %v605 = vpop.permute.xlu0 %604
      %606 = vset.pattern.permute.xlu0 0
      %607 = vperm.xlu0 %606, %v577
      %v608 = vpop.permute.xlu0 %607
      %609 = vset.pattern.permute.xlu0 0
      %610 = vperm.xlu0 %609, %v578
      %v611 = vpop.permute.xlu0 %610
      %612 = vset.pattern.permute.xlu0 0
      %613 = vperm.xlu0 %612, %v579
      %v614 = vpop.permute.xlu0 %613
      %v615 = vlaneseq
      %v616 = vshrl.u32 %v615, 7
      %v617 = vsub.s32 %v380, %v616
      %v618 = vrot.slane %v593, %v617
      %v619 = vlaneseq
      %v620 = vshrl.u32 %v619, 7
      %v621 = vsub.s32 %v385, %v620
      %v622 = vrot.slane %v596, %v621
      %v623 = vsel %vm390, %v622, %v618
      %v624 = vlaneseq
      %v625 = vshrl.u32 %v624, 7
      %v626 = vsub.s32 %v380, %v625
      %v627 = vrot.slane %v599, %v626
      %v628 = vlaneseq
      %v629 = vshrl.u32 %v628, 7
      %v630 = vsub.s32 %v385, %v629
      %v631 = vrot.slane %v602, %v630
      %v632 = vsel %vm390, %v631, %v627
      %v633 = vlaneseq
      %v634 = vshrl.u32 %v633, 7
      %v635 = vsub.s32 %v380, %v634
      %v636 = vrot.slane %v605, %v635
      %v637 = vlaneseq
      %v638 = vshrl.u32 %v637, 7
      %v639 = vsub.s32 %v385, %v638
      %v640 = vrot.slane %v608, %v639
      %v641 = vsel %vm390, %v640, %v636
      %v642 = vlaneseq
      %v643 = vshrl.u32 %v642, 7
      %v644 = vsub.s32 %v380, %v643
      %v645 = vrot.slane %v611, %v644
      %v646 = vlaneseq
      %v647 = vshrl.u32 %v646, 7
      %v648 = vsub.s32 %v385, %v647
      %v649 = vrot.slane %v614, %v648
      %v650 = vsel %vm390, %v649, %v645
      %v651 = vsel %vm419, %v632, %v623
      %v652 = vsel %vm421, %v641, %v651
      %v653 = vsel %vm423, %v650, %v652
      %v654 = vsel %vm185, %v653, 0
      %656 = vmatprep.subr.mxu0 0.0
      %657 = vmatpush1.msra.mxu0 0.0
      %658 = vmatprep.subr.mxu0 0.0
      %659 = vmatpush1.msra.mxu0 0.0
      %660 = vmatprep.subr.mxu0 0.0
      %661 = vmatpush1.msra.mxu0 0.0
      %662 = vmatprep.subr.mxu0 0.0
      %663 = vmatpush1.msra.mxu0 0.0
      %664 = vmatprep.subr.mxu0 0.0
      %665 = vmatpush1.msra.mxu0 0.0
      %666 = vmatprep.subr.mxu0 0.0
      %667 = vmatpush1.msra.mxu0 0.0
      %668 = vmatprep.subr.mxu0 0.0
      %669 = vmatpush1.msra.mxu0 0.0
      %670 = vmatprep.subr.mxu0 0.0
      %671 = vmatpush1.msra.mxu0 0.0
      %672 = vmatprep.subr.mxu0 0.0
      %673 = vmatpush1.msra.mxu0 0.0
      %674 = vmatprep.subr.mxu0 0.0
      %675 = vmatpush1.msra.mxu0 0.0
      %676 = vmatprep.subr.mxu0 0.0
      %677 = vmatpush1.msra.mxu0 0.0
      %678 = vmatprep.subr.mxu0 0.0
      %679 = vmatpush1.msra.mxu0 0.0
      %680 = vmatprep.subr.mxu0 0.0
      %681 = vmatpush1.msra.mxu0 0.0
      %682 = vmatprep.subr.mxu0 0.0
      %683 = vmatpush1.msra.mxu0 0.0
      %684 = vmatprep.subr.mxu0 0.0
      %685 = vmatpush1.msra.mxu0 %v582
      %686 = vmatprep.subr.mxu0 0.0
      %687 = vmatpush1.msra.mxu0 %v581
      %688 = vmatprep.subr.mxu0 0.0
      %689 = vmatpush2.msra.mxu0 0.0
      %690 = vmatprep.subr.mxu0 0.0
      %691 = vmatpush2.msra.mxu0 0.0
      %692 = vmatprep.subr.mxu0 0.0
      %693 = vmatpush2.msra.mxu0 0.0
      %694 = vmatprep.subr.mxu0 0.0
      %695 = vmatpush2.msra.mxu0 0.0
      %696 = vmatprep.subr.mxu0 0.0
      %697 = vmatpush2.msra.mxu0 0.0
      %698 = vmatprep.subr.mxu0 0.0
      %699 = vmatpush2.msra.mxu0 0.0
      %700 = vmatprep.subr.mxu0 0.0
      %701 = vmatpush2.msra.mxu0 0.0
      %702 = vmatprep.subr.mxu0 0.0
      %703 = vmatpush2.msra.mxu0 0.0
      %704 = vmatprep.subr.mxu0 0.0
      %705 = vmatpush2.msra.mxu0 0.0
      %706 = vmatprep.subr.mxu0 0.0
      %707 = vmatpush2.msra.mxu0 0.0
      %708 = vmatprep.subr.mxu0 0.0
      %709 = vmatpush2.msra.mxu0 0.0
      %710 = vmatprep.subr.mxu0 0.0
      %711 = vmatpush2.msra.mxu0 0.0
      %712 = vmatprep.subr.mxu0 0.0
      %713 = vmatpush2.msra.mxu0 0.0
      %714 = vmatprep.subr.mxu0 0.0
      %715 = vmatpush2.msra.mxu0 0.0
      %716 = vmatprep.subr.mxu0 0.0
      %717 = vmatpush2.msra.mxu0 0.0
      %718 = vmatprep.subr.mxu0 0.0
      %719 = vmatpush2.msra.mxu0 0.0
      %720 = vmatprep.mubr.f32.mxu0 0.0
      %721 = vmatmul.mubr.f32.gmra.mxu0 %v654
      %v722 = vpop.f32.mrf.mxu0
      %v723 = vadd.f32 0.0, %v722
      %v724 = vpop.f32.mrf.mxu0
      %725 = vdwg.mxu0
      %s726 = smul.u32 %s261, 4
      %s727 = scalar_lea.vmem [#allocation12], %s726
      %728 = vst [vmem:[%s727] sm:$0xf] %v723
    $region53: #{tpu_custom_call.1} parent=1 // loop_footer
      %s265 = sadd.s32 1, %s261
    $region54: #{tpu_custom_call.1} parent=1 // loop_footer_branch
      %260 = sbr.rel target = $region50
    $region55: #{tpu_custom_call.1} parent=1 // loop_exit
      _
    // Predicated region
    $region56: #{tpu_custom_call.1} parent=1 // pred_check
      _
    $region57: #{tpu_custom_call.1} parent=1 // pred_check_branch
      %730 = sbr.rel (0) target = $region59
    $region58: #{tpu_custom_call.1} parent=1 // pred_region
      %s732 = ssub.s32 128, 128
      %733 = vsyncadd [#allocation6], %s732
      %s734 = sshll.u32 [#allocation12], 4
      %s735 = int_to_ptr.vmem [resolvable:$true] %s734
      %740 = dma.vmem_to_hbm [thread:$0]  %s735, 128, %s5, [#allocation6], 64, 64, 4
    $region59: #{tpu_custom_call.1} parent=1 // pred_fallthru
      _
    // Predicated region
    $region60: #{tpu_custom_call.1} parent=1 // pred_check
      _
    $region61: #{tpu_custom_call.1} parent=1 // pred_check_branch
      %742 = sbr.rel (0) target = $region63
    $region62: #{tpu_custom_call.1} parent=1 // pred_region
      %743 = dma.done [#allocation6], 128
    $region63: #{tpu_custom_call.1} parent=1 // pred_fallthru
      _
    %744 = vsyncpa [#allocation5], 1
    %745 = vsyncpa [#allocation8], 1
    %746 = vsyncpa [#allocation11], 1
    %747 = vsyncpa [#allocation6], 1

</llo_original>
